<compile_context>
chip_gen: v7x
topology: tpu7x:2x2x1
jax: 0.10.0
libtpu: 0.0.40
codegen_flags: <defaults>
</compile_context>

<pallas_src>
import functools

import jax
import jax.numpy as jnp
from jax.experimental import pallas as pl
from jax.experimental.pallas import tpu as pltpu


def _round_up(x: int, m: int) -> int:
    return (x + m - 1) // m * m


# ---------------------------------------------------------------------------
# Kernel
# ---------------------------------------------------------------------------
def _vae_body(x, eps, w1_ref, b1_ref, w2_ref, b2_ref, w3_ref, b3_ref,
              w4_ref, b4_ref, out_ref):
    # ---- encoder: Linear -> ReLU -> fused Linear producing [mu | log_var] ----
    h = jnp.dot(x.astype(jnp.bfloat16), w1_ref[...],
                preferred_element_type=jnp.float32) + b1_ref[...]
    h = jnp.maximum(h, 0.0)

    mulv = jnp.dot(h.astype(jnp.bfloat16), w2_ref[...],
                   preferred_element_type=jnp.float32) + b2_ref[...]
    latent = mulv.shape[1] // 2
    mu = mulv[:, :latent]

    # ---- reparameterize (only when noise branch is compiled in) ----
    if eps is None:
        z = mu
    else:
        log_var = mulv[:, latent:]          # 16-lane slice; fine at these dims
        z = eps * jnp.exp(0.5 * log_var) + mu

    # ---- decoder: Linear -> ReLU -> Linear ----
    h2 = jnp.dot(z.astype(jnp.bfloat16), w3_ref[...],
                 preferred_element_type=jnp.float32) + b3_ref[...]
    h2 = jnp.maximum(h2, 0.0)
    recon = jnp.dot(h2.astype(jnp.bfloat16), w4_ref[...],
                    preferred_element_type=jnp.float32) + b4_ref[...]

    # Single fused output slab: [recon | mu | log_var]  (one DMA stream).
    out_ref[...] = jnp.concatenate([recon, mulv], axis=1)


def _vae_kernel_noise(x_ref, eps_ref, w1, b1, w2, b2, w3, b3, w4, b4, out_ref):
    _vae_body(x_ref[...], eps_ref[...], w1, b1, w2, b2, w3, b3, w4, b4, out_ref)


def _vae_kernel_nonoise(x_ref, w1, b1, w2, b2, w3, b3, w4, b4, out_ref):
    _vae_body(x_ref[...], None, w1, b1, w2, b2, w3, b3, w4, b4, out_ref)


# ---------------------------------------------------------------------------
# Params
# ---------------------------------------------------------------------------
def init_vae_params(key, input_dim: int, latent_dim: int):
    """Deterministic synthetic params (shapes match the PyTorch module)."""
    ks = jax.random.split(key, 8)
    hid = 2 * input_dim

    def lin(kw, kb, fan_in, fan_out):
        w = jax.random.normal(kw, (fan_in, fan_out), jnp.float32) / jnp.sqrt(
            jnp.float32(fan_in))
        b = jax.random.normal(kb, (1, fan_out), jnp.float32) * 0.01
        return w, b

    w1, b1 = lin(ks[0], ks[1], input_dim, hid)           # encoder[0]
    w2, b2 = lin(ks[2], ks[3], hid, 2 * latent_dim)      # encoder[2] (fused mu|logvar)
    w3, b3 = lin(ks[4], ks[5], latent_dim, hid)          # decoder[0]
    w4, b4 = lin(ks[6], ks[7], hid, input_dim)           # decoder[2]
    return dict(w1=w1, b1=b1, w2=w2, b2=b2, w3=w3, b3=b3, w4=w4, b4=b4)


# ---------------------------------------------------------------------------
# Tiling helper
# ---------------------------------------------------------------------------
def _choose_tiling(n, d_in, hid, latent, latent2, x_itemsize, eps_itemsize,
                   noise, max_tile_n):
    """Pick (tile_n, num_tiles, n_pad) with a VMEM-footprint cap and >=2 tiles
    when there is enough work to shard across two TensorCores (v7x)."""
    # Rough per-row VMEM bytes: double-buffered streamed I/O + f32 temporaries.
    row_bytes = 2 * (d_in * x_itemsize
                     + (latent * eps_itemsize if noise else 0)
                     + (d_in + latent2) * 4)
    row_bytes += 4 * (2 * hid + latent2 + latent)        # h, h2, mulv, z temps
    vmem_budget = 12 * 1024 * 1024                       # safe even on v5e's 16 MiB
    cap = max(8, (vmem_budget // row_bytes) // 8 * 8)
    tile_n = max(8, min(max_tile_n, cap))

    num_tiles = pl.cdiv(n, tile_n)
    if n >= 16 and num_tiles < 2:
        num_tiles = 2            # keep both v7x TensorCores busy when possible
    tile_n = _round_up(pl.cdiv(n, num_tiles), 8)         # padding waste < 8*num_tiles
    n_pad = num_tiles * tile_n
    return tile_n, num_tiles, n_pad


# ---------------------------------------------------------------------------
# Wrapper
# ---------------------------------------------------------------------------
@functools.partial(jax.jit, static_argnames=("noise", "max_tile_n"))
def vae_forward(x, params, eps=None, *, noise: bool = True, max_tile_n: int = 4096):
    """Returns (reconstruction, mu, log_var), matching VAE.forward."""
    n, d_in = x.shape
    hid = params["w1"].shape[1]
    latent2 = params["w2"].shape[1]
    latent = latent2 // 2

    if noise:
        if eps is None:
            raise ValueError("noise=True requires an explicit eps of shape "
                             f"({n}, {latent}).")
        if eps.shape != (n, latent):
            raise ValueError(f"eps has shape {eps.shape}, expected ({n}, {latent}).")

    tile_n, num_tiles, n_pad = _choose_tiling(
        n, d_in, hid, latent, latent2, x.dtype.itemsize,
        eps.dtype.itemsize if noise else 4, noise, max_tile_n)

    if n_pad != n:
        x = jnp.pad(x, ((0, n_pad - n), (0, 0)))
        if noise:
            eps = jnp.pad(eps, ((0, n_pad - n), (0, 0)))
    grid = (num_tiles,)

    # Pre-cast MXU weight operands to bf16 once; biases stay f32.
    w1 = params["w1"].astype(jnp.bfloat16)
    w2 = params["w2"].astype(jnp.bfloat16)
    w3 = params["w3"].astype(jnp.bfloat16)
    w4 = params["w4"].astype(jnp.bfloat16)
    weight_args = [w1, params["b1"], w2, params["b2"],
                   w3, params["b3"], w4, params["b4"]]

    def rows(shape):        # batch-tiled arrays
        return pl.BlockSpec(shape, lambda i: (i, 0))

    def resident(shape):    # VMEM-resident across all grid steps (constant block)
        return pl.BlockSpec(shape, lambda i: (0, 0))

    in_specs = [rows((tile_n, d_in))]
    args = [x]
    if noise:
        in_specs.append(rows((tile_n, latent)))
        args.append(eps)
    in_specs += [resident(tuple(w.shape)) for w in weight_args]
    args += weight_args

    out_width = d_in + latent2                         # [recon | mu | log_var]
    out_shape = jax.ShapeDtypeStruct((n_pad, out_width), jnp.float32)
    out_specs = rows((tile_n, out_width))

    flops = 2 * n_pad * (d_in * hid + hid * latent2 + latent * hid + hid * d_in)
    bytes_accessed = (
        n_pad * d_in * x.dtype.itemsize
        + (n_pad * latent * eps.dtype.itemsize if noise else 0)
        + sum(int(w.size) * w.dtype.itemsize for w in weight_args)
        + n_pad * out_width * 4
    )
    cost = pl.CostEstimate(
        flops=flops,
        transcendentals=n_pad * latent if noise else 0,
        bytes_accessed=bytes_accessed,
    )

    kernel = _vae_kernel_noise if noise else _vae_kernel_nonoise
    out = pl.pallas_call(
        kernel,
        out_shape=out_shape,
        grid=grid,
        in_specs=in_specs,
        out_specs=out_specs,
        compiler_params=pltpu.CompilerParams(
            dimension_semantics=("parallel",)),   # megacore sharding on v7x
        cost_estimate=cost,
    )(*args)

    recon = out[:n, :d_in]
    mu = out[:n, d_in:d_in + latent]
    log_var = out[:n, d_in + latent:]
    return recon, mu, log_var


# ---------------------------------------------------------------------------
# Plain-JAX reference (same bf16-operand / f32-accumulate math)
# ---------------------------------------------------------------------------
def vae_forward_ref(x, params, eps=None, noise: bool = True):
    latent = params["w2"].shape[1] // 2

    def dot(a, w):
        return jnp.dot(a.astype(jnp.bfloat16), w.astype(jnp.bfloat16),
                       preferred_element_type=jnp.float32)

    h = jnp.maximum(dot(x, params["w1"]) + params["b1"], 0.0)
    mulv = dot(h, params["w2"]) + params["b2"]
    mu, log_var = mulv[:, :latent], mulv[:, latent:]
    z = eps * jnp.exp(0.5 * log_var) + mu if noise else mu
    h2 = jnp.maximum(dot(z, params["w3"]) + params["b3"], 0.0)
    recon = dot(h2, params["w4"]) + params["b4"]
    return recon, mu, log_var


if __name__ == "__main__":
    key = jax.random.PRNGKey(0)
    k_param, k_x, k_eps, k_x2, k_eps2 = jax.random.split(key, 5)

    input_dim = 32
    latent_dim = 16
    params = init_vae_params(k_param, input_dim, latent_dim)

    # --- small batch: single-tile grid, noise branch -----------------------
    batch = 8
    x = jax.random.normal(k_x, (batch, input_dim), jnp.float32)
    eps = jax.random.normal(k_eps, (batch, latent_dim), jnp.float32)

    recon, mu, log_var = vae_forward(x, params, eps, noise=True)
    jax.block_until_ready((recon, mu, log_var))
    r_ref, mu_ref, lv_ref = vae_forward_ref(x, params, eps, noise=True)
    assert jnp.allclose(recon, r_ref, atol=2e-3, rtol=2e-3)
    assert jnp.allclose(mu, mu_ref, atol=2e-3, rtol=2e-3)
    assert jnp.allclose(log_var, lv_ref, atol=2e-3, rtol=2e-3)

    # inference path: z = mu, no eps input / DMA at all
    r2, mu2, lv2 = vae_forward(x, params, noise=False)
    jax.block_until_ready((r2, mu2, lv2))
    r2_ref, mu2_ref, lv2_ref = vae_forward_ref(x, params, noise=False)
    assert jnp.allclose(r2, r2_ref, atol=2e-3, rtol=2e-3)
    assert jnp.allclose(mu2, mu2_ref, atol=2e-3, rtol=2e-3)
    assert jnp.allclose(lv2, lv2_ref, atol=2e-3, rtol=2e-3)

    # --- larger ragged batch: exercises 2-tile grid + batch padding --------
    batch2 = 300
    x2 = jax.random.normal(k_x2, (batch2, input_dim), jnp.float32)
    eps2 = jax.random.normal(k_eps2, (batch2, latent_dim), jnp.float32)
    r3, mu3, lv3 = vae_forward(x2, params, eps2, noise=True)
    jax.block_until_ready((r3, mu3, lv3))
    r3_ref, mu3_ref, lv3_ref = vae_forward_ref(x2, params, eps2, noise=True)
    assert jnp.allclose(r3, r3_ref, atol=2e-3, rtol=2e-3)
    assert jnp.allclose(mu3, mu3_ref, atol=2e-3, rtol=2e-3)
    assert jnp.allclose(lv3, lv3_ref, atol=2e-3, rtol=2e-3)

    print("KERNEL_OK")
</pallas_src>

<mosaic_0001>
module attributes {stable_mosaic.version = 11 : i64} {
  func.func @_vae_kernel_noise(%arg0: i32, %arg1: memref<8x32xf32, #tpu.memory_space<vmem>>, %arg2: memref<8x16xf32, #tpu.memory_space<vmem>>, %arg3: memref<32x64xbf16, #tpu.memory_space<vmem>>, %arg4: memref<1x64xf32, #tpu.memory_space<vmem>>, %arg5: memref<64x32xbf16, #tpu.memory_space<vmem>>, %arg6: memref<1x32xf32, #tpu.memory_space<vmem>>, %arg7: memref<16x64xbf16, #tpu.memory_space<vmem>>, %arg8: memref<1x64xf32, #tpu.memory_space<vmem>>, %arg9: memref<64x32xbf16, #tpu.memory_space<vmem>>, %arg10: memref<1x32xf32, #tpu.memory_space<vmem>>, %arg11: memref<8x64xf32, #tpu.memory_space<vmem>>) attributes {dimension_semantics = [#tpu.dimension_semantics<parallel>], iteration_bounds = array<i64: 1>, scalar_prefetch = 0 : i64, scratch_operands = 0 : i64, tpu.core_type = #tpu.core_type<tc>, window_params = [{transform_indices = @transform_0, window_bounds = array<i64: 8, 32>}, {transform_indices = @transform_1, window_bounds = array<i64: 8, 16>}, {pipeline_mode = #tpu.pipeline_mode<synchronous>, transform_indices = @transform_2, window_bounds = array<i64: 32, 64>}, {pipeline_mode = #tpu.pipeline_mode<synchronous>, transform_indices = @transform_3, window_bounds = array<i64: 1, 64>}, {pipeline_mode = #tpu.pipeline_mode<synchronous>, transform_indices = @transform_4, window_bounds = array<i64: 64, 32>}, {pipeline_mode = #tpu.pipeline_mode<synchronous>, transform_indices = @transform_5, window_bounds = array<i64: 1, 32>}, {pipeline_mode = #tpu.pipeline_mode<synchronous>, transform_indices = @transform_6, window_bounds = array<i64: 16, 64>}, {pipeline_mode = #tpu.pipeline_mode<synchronous>, transform_indices = @transform_7, window_bounds = array<i64: 1, 64>}, {pipeline_mode = #tpu.pipeline_mode<synchronous>, transform_indices = @transform_8, window_bounds = array<i64: 64, 32>}, {pipeline_mode = #tpu.pipeline_mode<synchronous>, transform_indices = @transform_9, window_bounds = array<i64: 1, 32>}, {transform_indices = @transform_10, window_bounds = array<i64: 8, 64>}]} {
    %c0 = arith.constant 0 : index
    %c0_0 = arith.constant 0 : index
    %0 = vector.load %arg1[%c0, %c0_0] : memref<8x32xf32, #tpu.memory_space<vmem>>, vector<8x32xf32>
    %c0_1 = arith.constant 0 : index
    %c0_2 = arith.constant 0 : index
    %1 = vector.load %arg2[%c0_1, %c0_2] : memref<8x16xf32, #tpu.memory_space<vmem>>, vector<8x16xf32>
    %2 = arith.truncf %0 : vector<8x32xf32> to vector<8x32xbf16>
    %c0_3 = arith.constant 0 : index
    %c0_4 = arith.constant 0 : index
    %3 = vector.load %arg3[%c0_3, %c0_4] : memref<32x64xbf16, #tpu.memory_space<vmem>>, vector<32x64xbf16>
    %cst = arith.constant dense<0.000000e+00> : vector<8x64xf32>
    %4 = tpu.matmul %2, %3, %cst {dimension_numbers = #tpu.dot_dimension_numbers<[1], [0], [0], [1], [0, 0, 1, 1], [], []>} : vector<8x32xbf16>, vector<32x64xbf16>, vector<8x64xf32> -> vector<8x64xf32>
    %c0_5 = arith.constant 0 : index
    %c0_6 = arith.constant 0 : index
    %5 = vector.load %arg4[%c0_5, %c0_6] : memref<1x64xf32, #tpu.memory_space<vmem>>, vector<1x64xf32>
    %6 = vector.broadcast %5 : vector<1x64xf32> to vector<8x64xf32>
    %7 = arith.addf %4, %6 : vector<8x64xf32>
    %cst_7 = arith.constant 0.000000e+00 : f32
    %8 = vector.broadcast %cst_7 : f32 to vector<8x64xf32>
    %9 = arith.maximumf %7, %8 : vector<8x64xf32>
    %10 = arith.truncf %9 : vector<8x64xf32> to vector<8x64xbf16>
    %c0_8 = arith.constant 0 : index
    %c0_9 = arith.constant 0 : index
    %11 = vector.load %arg5[%c0_8, %c0_9] : memref<64x32xbf16, #tpu.memory_space<vmem>>, vector<64x32xbf16>
    %cst_10 = arith.constant dense<0.000000e+00> : vector<8x32xf32>
    %12 = tpu.matmul %10, %11, %cst_10 {dimension_numbers = #tpu.dot_dimension_numbers<[1], [0], [0], [1], [0, 0, 1, 1], [], []>} : vector<8x64xbf16>, vector<64x32xbf16>, vector<8x32xf32> -> vector<8x32xf32>
    %c0_11 = arith.constant 0 : index
    %c0_12 = arith.constant 0 : index
    %13 = vector.load %arg6[%c0_11, %c0_12] : memref<1x32xf32, #tpu.memory_space<vmem>>, vector<1x32xf32>
    %14 = vector.broadcast %13 : vector<1x32xf32> to vector<8x32xf32>
    %15 = arith.addf %12, %14 : vector<8x32xf32>
    %16 = vector.extract_strided_slice %15 {offsets = [0, 0], sizes = [8, 16], strides = [1, 1]} : vector<8x32xf32> to vector<8x16xf32>
    %17 = vector.extract_strided_slice %15 {offsets = [0, 16], sizes = [8, 16], strides = [1, 1]} : vector<8x32xf32> to vector<8x16xf32>
    %cst_13 = arith.constant 5.000000e-01 : f32
    %18 = vector.broadcast %cst_13 : f32 to vector<8x16xf32>
    %19 = arith.mulf %18, %17 : vector<8x16xf32>
    %20 = math.exp %19 : vector<8x16xf32>
    %21 = arith.mulf %1, %20 : vector<8x16xf32>
    %22 = arith.addf %21, %16 : vector<8x16xf32>
    %23 = arith.truncf %22 : vector<8x16xf32> to vector<8x16xbf16>
    %c0_14 = arith.constant 0 : index
    %c0_15 = arith.constant 0 : index
    %24 = vector.load %arg7[%c0_14, %c0_15] : memref<16x64xbf16, #tpu.memory_space<vmem>>, vector<16x64xbf16>
    %cst_16 = arith.constant dense<0.000000e+00> : vector<8x64xf32>
    %25 = tpu.matmul %23, %24, %cst_16 {dimension_numbers = #tpu.dot_dimension_numbers<[1], [0], [0], [1], [0, 0, 1, 1], [], []>} : vector<8x16xbf16>, vector<16x64xbf16>, vector<8x64xf32> -> vector<8x64xf32>
    %c0_17 = arith.constant 0 : index
    %c0_18 = arith.constant 0 : index
    %26 = vector.load %arg8[%c0_17, %c0_18] : memref<1x64xf32, #tpu.memory_space<vmem>>, vector<1x64xf32>
    %27 = vector.broadcast %26 : vector<1x64xf32> to vector<8x64xf32>
    %28 = arith.addf %25, %27 : vector<8x64xf32>
    %cst_19 = arith.constant 0.000000e+00 : f32
    %29 = vector.broadcast %cst_19 : f32 to vector<8x64xf32>
    %30 = arith.maximumf %28, %29 : vector<8x64xf32>
    %31 = arith.truncf %30 : vector<8x64xf32> to vector<8x64xbf16>
    %c0_20 = arith.constant 0 : index
    %c0_21 = arith.constant 0 : index
    %32 = vector.load %arg9[%c0_20, %c0_21] : memref<64x32xbf16, #tpu.memory_space<vmem>>, vector<64x32xbf16>
    %cst_22 = arith.constant dense<0.000000e+00> : vector<8x32xf32>
    %33 = tpu.matmul %31, %32, %cst_22 {dimension_numbers = #tpu.dot_dimension_numbers<[1], [0], [0], [1], [0, 0, 1, 1], [], []>} : vector<8x64xbf16>, vector<64x32xbf16>, vector<8x32xf32> -> vector<8x32xf32>
    %c0_23 = arith.constant 0 : index
    %c0_24 = arith.constant 0 : index
    %34 = vector.load %arg10[%c0_23, %c0_24] : memref<1x32xf32, #tpu.memory_space<vmem>>, vector<1x32xf32>
    %35 = vector.broadcast %34 : vector<1x32xf32> to vector<8x32xf32>
    %36 = arith.addf %33, %35 : vector<8x32xf32>
    %37 = tpu.concatenate %36, %15 in 1 : vector<8x32xf32>, vector<8x32xf32> -> vector<8x64xf32>
    %c0_25 = arith.constant 0 : index
    %c0_26 = arith.constant 0 : index
    %38 = vector.load %arg11[%c0_25, %c0_26] : memref<8x64xf32, #tpu.memory_space<vmem>>, vector<8x64xf32>
    tpu.vector_store %arg11[%c0_25, %c0_26], %37 {strides = array<i32>} : memref<8x64xf32, #tpu.memory_space<vmem>>, vector<8x64xf32>,
    return
  }
  func.func @transform_0(%arg0: i32) -> (i32, i32) {
    %c0_i32 = arith.constant 0 : i32
    %c0_i32_0 = arith.constant 0 : i32
    return %arg0, %c0_i32 : i32, i32
  }
  func.func @transform_1(%arg0: i32) -> (i32, i32) {
    %c0_i32 = arith.constant 0 : i32
    %c0_i32_0 = arith.constant 0 : i32
    return %arg0, %c0_i32 : i32, i32
  }
  func.func @transform_2(%arg0: i32) -> (i32, i32) {
    %c0_i32 = arith.constant 0 : i32
    %c0_i32_0 = arith.constant 0 : i32
    %c0_i32_1 = arith.constant 0 : i32
    return %c0_i32, %c0_i32_0 : i32, i32
  }
  func.func @transform_3(%arg0: i32) -> (i32, i32) {
    %c0_i32 = arith.constant 0 : i32
    %c0_i32_0 = arith.constant 0 : i32
    %c0_i32_1 = arith.constant 0 : i32
    return %c0_i32, %c0_i32_0 : i32, i32
  }
  func.func @transform_4(%arg0: i32) -> (i32, i32) {
    %c0_i32 = arith.constant 0 : i32
    %c0_i32_0 = arith.constant 0 : i32
    %c0_i32_1 = arith.constant 0 : i32
    return %c0_i32, %c0_i32_0 : i32, i32
  }
  func.func @transform_5(%arg0: i32) -> (i32, i32) {
    %c0_i32 = arith.constant 0 : i32
    %c0_i32_0 = arith.constant 0 : i32
    %c0_i32_1 = arith.constant 0 : i32
    return %c0_i32, %c0_i32_0 : i32, i32
  }
  func.func @transform_6(%arg0: i32) -> (i32, i32) {
    %c0_i32 = arith.constant 0 : i32
    %c0_i32_0 = arith.constant 0 : i32
    %c0_i32_1 = arith.constant 0 : i32
    return %c0_i32, %c0_i32_0 : i32, i32
  }
  func.func @transform_7(%arg0: i32) -> (i32, i32) {
    %c0_i32 = arith.constant 0 : i32
    %c0_i32_0 = arith.constant 0 : i32
    %c0_i32_1 = arith.constant 0 : i32
    return %c0_i32, %c0_i32_0 : i32, i32
  }
  func.func @transform_8(%arg0: i32) -> (i32, i32) {
    %c0_i32 = arith.constant 0 : i32
    %c0_i32_0 = arith.constant 0 : i32
    %c0_i32_1 = arith.constant 0 : i32
    return %c0_i32, %c0_i32_0 : i32, i32
  }
  func.func @transform_9(%arg0: i32) -> (i32, i32) {
    %c0_i32 = arith.constant 0 : i32
    %c0_i32_0 = arith.constant 0 : i32
    %c0_i32_1 = arith.constant 0 : i32
    return %c0_i32, %c0_i32_0 : i32, i32
  }
  func.func @transform_10(%arg0: i32) -> (i32, i32) {
    %c0_i32 = arith.constant 0 : i32
    %c0_i32_0 = arith.constant 0 : i32
    return %arg0, %c0_i32 : i32, i32
  }
}

</mosaic_0001>

<llo_original>
// kernel: vae_forward.1
$region0: #{vae_forward.1}
  #allocation0 [shape = 'u32[]', space=smem, size = 0x4, offset = 0x4, fixed_abs, tag = 'smem constant byte address 0x4 - core index']
  #allocation1 [shape = 'u32[144,128]{1,0:T(1,128)}', space=vmem, size = 0x12000, scoped, tag = 'internal scratch']
  %s0 = inlined_call_operand.vmem [shape: f32[8,32], index: 0, kind: input, shape index: {}]
  %s1 = inlined_call_operand.vmem [shape: f32[8,16], index: 1, kind: input, shape index: {}]
  %s2 = inlined_call_operand.vmem [shape: bf16[32,64], index: 2, kind: input, shape index: {}]
  %s3 = inlined_call_operand.vmem [shape: f32[1,64], index: 3, kind: input, shape index: {}]
  %s4 = inlined_call_operand.vmem [shape: bf16[64,32], index: 4, kind: input, shape index: {}]
  %s5 = inlined_call_operand.vmem [shape: f32[1,32], index: 5, kind: input, shape index: {}]
  %s6 = inlined_call_operand.vmem [shape: bf16[16,64], index: 6, kind: input, shape index: {}]
  %s7 = inlined_call_operand.vmem [shape: f32[1,64], index: 7, kind: input, shape index: {}]
  %s8 = inlined_call_operand.vmem [shape: bf16[64,32], index: 8, kind: input, shape index: {}]
  %s9 = inlined_call_operand.vmem [shape: f32[1,32], index: 9, kind: input, shape index: {}]
  %s10 = inlined_call_operand.vmem [shape: f32[8,64], index: 10, kind: output, shape index: {}]
  %s11 = sld [smem:[#allocation0]]
  $region50: #{vae_forward.1} parent=0
    _
  %s13 = ssub.s32 1, %s11
  %s14 = scalar_select 0, %s13, %s11
  // Predicated region
  $region2: #{vae_forward.1} parent=0 // pred_check
    _
  $region3: #{vae_forward.1} parent=0 // pred_check_branch
    %16 = sbr.rel (0) target = $region5
  $region4: #{vae_forward.1} parent=0 // pred_region
    _
  $region5: #{vae_forward.1} parent=0 // pred_fallthru
    _
  // Predicated region
  $region6: #{vae_forward.1} parent=0 // pred_check
    _
  $region7: #{vae_forward.1} parent=0 // pred_check_branch
    %18 = sbr.rel (0) target = $region9
  $region8: #{vae_forward.1} parent=0 // pred_region
    _
  $region9: #{vae_forward.1} parent=0 // pred_fallthru
    _
  // Predicated region
  $region10: #{vae_forward.1} parent=0 // pred_check
    _
  $region11: #{vae_forward.1} parent=0 // pred_check_branch
    %20 = sbr.rel (0) target = $region13
  $region12: #{vae_forward.1} parent=0 // pred_region
    _
  $region13: #{vae_forward.1} parent=0 // pred_fallthru
    _
  // Predicated region
  $region14: #{vae_forward.1} parent=0 // pred_check
    _
  $region15: #{vae_forward.1} parent=0 // pred_check_branch
    %22 = sbr.rel (0) target = $region17
  $region16: #{vae_forward.1} parent=0 // pred_region
    _
  $region17: #{vae_forward.1} parent=0 // pred_fallthru
    _
  // Predicated region
  $region18: #{vae_forward.1} parent=0 // pred_check
    _
  $region19: #{vae_forward.1} parent=0 // pred_check_branch
    %24 = sbr.rel (0) target = $region21
  $region20: #{vae_forward.1} parent=0 // pred_region
    _
  $region21: #{vae_forward.1} parent=0 // pred_fallthru
    _
  // Predicated region
  $region22: #{vae_forward.1} parent=0 // pred_check
    _
  $region23: #{vae_forward.1} parent=0 // pred_check_branch
    %26 = sbr.rel (0) target = $region25
  $region24: #{vae_forward.1} parent=0 // pred_region
    _
  $region25: #{vae_forward.1} parent=0 // pred_fallthru
    _
  // Predicated region
  $region26: #{vae_forward.1} parent=0 // pred_check
    _
  $region27: #{vae_forward.1} parent=0 // pred_check_branch
    %28 = sbr.rel (0) target = $region29
  $region28: #{vae_forward.1} parent=0 // pred_region
    _
  $region29: #{vae_forward.1} parent=0 // pred_fallthru
    _
  // Predicated region
  $region30: #{vae_forward.1} parent=0 // pred_check
    _
  $region31: #{vae_forward.1} parent=0 // pred_check_branch
    %30 = sbr.rel (0) target = $region33
  $region32: #{vae_forward.1} parent=0 // pred_region
    _
  $region33: #{vae_forward.1} parent=0 // pred_fallthru
    _
  // Predicated region
  $region34: #{vae_forward.1} parent=0 // pred_check
    _
  $region35: #{vae_forward.1} parent=0 // pred_check_branch
    %32 = sbr.rel (0) target = $region37
  $region36: #{vae_forward.1} parent=0 // pred_region
    _
  $region37: #{vae_forward.1} parent=0 // pred_fallthru
    _
  // Predicated region
  $region38: #{vae_forward.1} parent=0 // pred_check
    _
  $region39: #{vae_forward.1} parent=0 // pred_check_branch
    %34 = sbr.rel (0) target = $region41
  $region40: #{vae_forward.1} parent=0 // pred_region
    _
  $region41: #{vae_forward.1} parent=0 // pred_fallthru
    _
  %v36 = vld [vmem:[%s0] sm:$0xff]
  %v37 = vld [vmem:[%s1] sm:$0xff]
  %v38 = vpack.c.bf16 %v36, %v36
  %v39 = vld [vmem:[%s2] sm:$0xf]
  %v40 = vld [vmem:[%s2 + $0x4] sm:$0xf]
  %v41 = vld [vmem:[%s2 + $0x8] sm:$0xf]
  %v42 = vld [vmem:[%s2 + $0xc] sm:$0xf]
  %v43 = vld [vmem:[%s3] sm:$0x1]
  %v45 = vlaneseq
  %v46 = vshrl.u32 %v45, 7
  %v47 = vsub.s32 0, %v46
  %v48 = vrot.slane %v43, %v47
  %v54 = vunpack.c.l.b16 %v39
  %v55 = vunpack.c.l.b16 %v40
  %v56 = vunpack.c.l.b16 %v41
  %v57 = vunpack.c.l.b16 %v42
  %v58 = vpack.c.b16 %v55, %v54
  %v59 = vpack.c.b16 %v57, %v56
  %vm62 = vcmask 261120
  %v64 = vsel %vm62, %v38, 0
  %66 = vmatprep.subr.bf16.mxu0 0
  %67 = vmatpush1.bf16.msra.mxu0 %v58
  %68 = vmatprep.subr.bf16.mxu0 0
  %69 = vmatpush1.bf16.msra.mxu0 %v59
  %70 = vmatprep.subr.bf16.mxu0 0
  %71 = vmatpush1.bf16.msra.mxu0 0
  %72 = vmatprep.subr.bf16.mxu0 0
  %73 = vmatpush1.bf16.msra.mxu0 0
  %74 = vmatprep.subr.bf16.mxu0 0
  %75 = vmatpush1.bf16.msra.mxu0 0
  %76 = vmatprep.subr.bf16.mxu0 0
  %77 = vmatpush1.bf16.msra.mxu0 0
  %78 = vmatprep.subr.bf16.mxu0 0
  %79 = vmatpush1.bf16.msra.mxu0 0
  %80 = vmatprep.subr.bf16.mxu0 0
  %81 = vmatpush1.bf16.msra.mxu0 0
  %82 = vmatprep.subr.bf16.mxu0 0
  %83 = vmatpush1.bf16.msra.mxu0 0
  %84 = vmatprep.subr.bf16.mxu0 0
  %85 = vmatpush1.bf16.msra.mxu0 0
  %86 = vmatprep.subr.bf16.mxu0 0
  %87 = vmatpush1.bf16.msra.mxu0 0
  %88 = vmatprep.subr.bf16.mxu0 0
  %89 = vmatpush1.bf16.msra.mxu0 0
  %90 = vmatprep.subr.bf16.mxu0 0
  %91 = vmatpush1.bf16.msra.mxu0 0
  %92 = vmatprep.subr.bf16.mxu0 0
  %93 = vmatpush1.bf16.msra.mxu0 0
  %94 = vmatprep.subr.bf16.mxu0 0
  %95 = vmatpush1.bf16.msra.mxu0 0
  %96 = vmatprep.subr.bf16.mxu0 0
  %97 = vmatpush1.bf16.msra.mxu0 0
  %98 = vmatprep.mubr.bf16.mxu0 0
  %99 = vmatmul.mubr.bf16.gmra.mrb[0].mxu0 %v64
  %v100 = vpop.f32.mrb[0].mxu0
  %v101 = vadd.f32 %v48, %v100
  %v102 = vpop.f32.mrb[0].mxu0
  %v103 = vpop.f32.mrb[0].mxu0
  %v104 = vpop.f32.mrb[0].mxu0
  %105 = vdwg.mxu0
  %v106 = vmax.f32 %v101, 0.0
  %v107 = vpack.c.bf16 %v106, %v106
  %v108 = vld [vmem:[%s4] sm:$0xf]
  %v109 = vld [vmem:[%s4 + $0x4] sm:$0xf]
  %v110 = vld [vmem:[%s4 + $0x8] sm:$0xf]
  %v111 = vld [vmem:[%s4 + $0xc] sm:$0xf]
  %v112 = vld [vmem:[%s4 + $0x10] sm:$0xf]
  %v113 = vld [vmem:[%s4 + $0x14] sm:$0xf]
  %v114 = vld [vmem:[%s4 + $0x18] sm:$0xf]
  %v115 = vld [vmem:[%s4 + $0x1c] sm:$0xf]
  %v116 = vld [vmem:[%s5] sm:$0x1]
  %v118 = vlaneseq
  %v119 = vshrl.u32 %v118, 7
  %v120 = vsub.s32 0, %v119
  %v121 = vrot.slane %v116, %v120
  %v131 = vunpack.c.l.b16 %v108
  %v132 = vunpack.c.l.b16 %v109
  %v133 = vunpack.c.l.b16 %v110
  %v134 = vunpack.c.l.b16 %v111
  %v135 = vunpack.c.l.b16 %v112
  %v136 = vunpack.c.l.b16 %v113
  %v137 = vunpack.c.l.b16 %v114
  %v138 = vunpack.c.l.b16 %v115
  %v139 = vpack.c.b16 %v132, %v131
  %v140 = vpack.c.b16 %v134, %v133
  %v141 = vpack.c.b16 %v136, %v135
  %v142 = vpack.c.b16 %v138, %v137
  %vm147 = vcmask 523264
  %v149 = vsel %vm147, %v107, 0
  %151 = vmatprep.subr.bf16.mxu0 0
  %152 = vmatpush1.bf16.msra.mxu0 %v139
  %153 = vmatprep.subr.bf16.mxu0 0
  %154 = vmatpush1.bf16.msra.mxu0 %v140
  %155 = vmatprep.subr.bf16.mxu0 0
  %156 = vmatpush1.bf16.msra.mxu0 %v141
  %157 = vmatprep.subr.bf16.mxu0 0
  %158 = vmatpush1.bf16.msra.mxu0 %v142
  %159 = vmatprep.subr.bf16.mxu0 0
  %160 = vmatpush1.bf16.msra.mxu0 0
  %161 = vmatprep.subr.bf16.mxu0 0
  %162 = vmatpush1.bf16.msra.mxu0 0
  %163 = vmatprep.subr.bf16.mxu0 0
  %164 = vmatpush1.bf16.msra.mxu0 0
  %165 = vmatprep.subr.bf16.mxu0 0
  %166 = vmatpush1.bf16.msra.mxu0 0
  %167 = vmatprep.subr.bf16.mxu0 0
  %168 = vmatpush1.bf16.msra.mxu0 0
  %169 = vmatprep.subr.bf16.mxu0 0
  %170 = vmatpush1.bf16.msra.mxu0 0
  %171 = vmatprep.subr.bf16.mxu0 0
  %172 = vmatpush1.bf16.msra.mxu0 0
  %173 = vmatprep.subr.bf16.mxu0 0
  %174 = vmatpush1.bf16.msra.mxu0 0
  %175 = vmatprep.subr.bf16.mxu0 0
  %176 = vmatpush1.bf16.msra.mxu0 0
  %177 = vmatprep.subr.bf16.mxu0 0
  %178 = vmatpush1.bf16.msra.mxu0 0
  %179 = vmatprep.subr.bf16.mxu0 0
  %180 = vmatpush1.bf16.msra.mxu0 0
  %181 = vmatprep.subr.bf16.mxu0 0
  %182 = vmatpush1.bf16.msra.mxu0 0
  %183 = vmatprep.mubr.bf16.mxu0 0
  %184 = vmatmul.mubr.bf16.gmra.mrb[0].mxu0 %v149
  %v185 = vpop.f32.mrb[0].mxu0
  %v186 = vadd.f32 %v121, %v185
  %v187 = vpop.f32.mrb[0].mxu0
  %v188 = vpop.f32.mrb[0].mxu0
  %v189 = vpop.f32.mrb[0].mxu0
  %190 = vdwg.mxu0
  %v191 = vmul.f32 %v186, 0.5
  %v192 = vmul.f32 %v191, 1.442695
  %v193 = vpow.pop %v192
  %195 = vrot.lane.b32.xlu0 %v193, 112
  %v196 = vpop.permute.xlu0 %195
  %v198 = vmul.f32 %v37, %v196
  %v199 = vadd.f32 %v198, %v186
  %v200 = vpack.c.bf16 %v199, %v199
  %v201 = vld [vmem:[%s6] sm:$0xf]
  %v202 = vld [vmem:[%s6 + $0x4] sm:$0xf]
  %v203 = vld [vmem:[%s7] sm:$0x1]
  %v205 = vlaneseq
  %v206 = vshrl.u32 %v205, 7
  %v207 = vsub.s32 0, %v206
  %v208 = vrot.slane %v203, %v207
  %v212 = vunpack.c.l.b16 %v201
  %v213 = vunpack.c.l.b16 %v202
  %v214 = vpack.c.b16 %v213, %v212
  %vm216 = vcmask 130048
  %v218 = vsel %vm216, %v200, 0
  %220 = vmatprep.subr.bf16.mxu0 0
  %221 = vmatpush1.bf16.msra.mxu0 %v214
  %222 = vmatprep.subr.bf16.mxu0 0
  %223 = vmatpush1.bf16.msra.mxu0 0
  %224 = vmatprep.subr.bf16.mxu0 0
  %225 = vmatpush1.bf16.msra.mxu0 0
  %226 = vmatprep.subr.bf16.mxu0 0
  %227 = vmatpush1.bf16.msra.mxu0 0
  %228 = vmatprep.subr.bf16.mxu0 0
  %229 = vmatpush1.bf16.msra.mxu0 0
  %230 = vmatprep.subr.bf16.mxu0 0
  %231 = vmatpush1.bf16.msra.mxu0 0
  %232 = vmatprep.subr.bf16.mxu0 0
  %233 = vmatpush1.bf16.msra.mxu0 0
  %234 = vmatprep.subr.bf16.mxu0 0
  %235 = vmatpush1.bf16.msra.mxu0 0
  %236 = vmatprep.subr.bf16.mxu0 0
  %237 = vmatpush1.bf16.msra.mxu0 0
  %238 = vmatprep.subr.bf16.mxu0 0
  %239 = vmatpush1.bf16.msra.mxu0 0
  %240 = vmatprep.subr.bf16.mxu0 0
  %241 = vmatpush1.bf16.msra.mxu0 0
  %242 = vmatprep.subr.bf16.mxu0 0
  %243 = vmatpush1.bf16.msra.mxu0 0
  %244 = vmatprep.subr.bf16.mxu0 0
  %245 = vmatpush1.bf16.msra.mxu0 0
  %246 = vmatprep.subr.bf16.mxu0 0
  %247 = vmatpush1.bf16.msra.mxu0 0
  %248 = vmatprep.subr.bf16.mxu0 0
  %249 = vmatpush1.bf16.msra.mxu0 0
  %250 = vmatprep.subr.bf16.mxu0 0
  %251 = vmatpush1.bf16.msra.mxu0 0
  %252 = vmatprep.mubr.bf16.mxu0 0
  %253 = vmatmul.mubr.bf16.gmra.mrb[0].mxu0 %v218
  %v254 = vpop.f32.mrb[0].mxu0
  %v255 = vadd.f32 %v208, %v254
  %v256 = vpop.f32.mrb[0].mxu0
  %v257 = vpop.f32.mrb[0].mxu0
  %v258 = vpop.f32.mrb[0].mxu0
  %259 = vdwg.mxu0
  %v260 = vmax.f32 %v255, 0.0
  %v261 = vpack.c.bf16 %v260, %v260
  %v262 = vld [vmem:[%s8] sm:$0xf]
  %v263 = vld [vmem:[%s8 + $0x4] sm:$0xf]
  %v264 = vld [vmem:[%s8 + $0x8] sm:$0xf]
  %v265 = vld [vmem:[%s8 + $0xc] sm:$0xf]
  %v266 = vld [vmem:[%s8 + $0x10] sm:$0xf]
  %v267 = vld [vmem:[%s8 + $0x14] sm:$0xf]
  %v268 = vld [vmem:[%s8 + $0x18] sm:$0xf]
  %v269 = vld [vmem:[%s8 + $0x1c] sm:$0xf]
  %v270 = vld [vmem:[%s9] sm:$0x1]
  %v272 = vlaneseq
  %v273 = vshrl.u32 %v272, 7
  %v274 = vsub.s32 0, %v273
  %v275 = vrot.slane %v270, %v274
  %v285 = vunpack.c.l.b16 %v262
  %v286 = vunpack.c.l.b16 %v263
  %v287 = vunpack.c.l.b16 %v264
  %v288 = vunpack.c.l.b16 %v265
  %v289 = vunpack.c.l.b16 %v266
  %v290 = vunpack.c.l.b16 %v267
  %v291 = vunpack.c.l.b16 %v268
  %v292 = vunpack.c.l.b16 %v269
  %v293 = vpack.c.b16 %v286, %v285
  %v294 = vpack.c.b16 %v288, %v287
  %v295 = vpack.c.b16 %v290, %v289
  %v296 = vpack.c.b16 %v292, %v291
  %v302 = vsel %vm147, %v261, 0
  %304 = vmatprep.subr.bf16.mxu0 0
  %305 = vmatpush1.bf16.msra.mxu0 %v293
  %306 = vmatprep.subr.bf16.mxu0 0
  %307 = vmatpush1.bf16.msra.mxu0 %v294
  %308 = vmatprep.subr.bf16.mxu0 0
  %309 = vmatpush1.bf16.msra.mxu0 %v295
  %310 = vmatprep.subr.bf16.mxu0 0
  %311 = vmatpush1.bf16.msra.mxu0 %v296
  %312 = vmatprep.subr.bf16.mxu0 0
  %313 = vmatpush1.bf16.msra.mxu0 0
  %314 = vmatprep.subr.bf16.mxu0 0
  %315 = vmatpush1.bf16.msra.mxu0 0
  %316 = vmatprep.subr.bf16.mxu0 0
  %317 = vmatpush1.bf16.msra.mxu0 0
  %318 = vmatprep.subr.bf16.mxu0 0
  %319 = vmatpush1.bf16.msra.mxu0 0
  %320 = vmatprep.subr.bf16.mxu0 0
  %321 = vmatpush1.bf16.msra.mxu0 0
  %322 = vmatprep.subr.bf16.mxu0 0
  %323 = vmatpush1.bf16.msra.mxu0 0
  %324 = vmatprep.subr.bf16.mxu0 0
  %325 = vmatpush1.bf16.msra.mxu0 0
  %326 = vmatprep.subr.bf16.mxu0 0
  %327 = vmatpush1.bf16.msra.mxu0 0
  %328 = vmatprep.subr.bf16.mxu0 0
  %329 = vmatpush1.bf16.msra.mxu0 0
  %330 = vmatprep.subr.bf16.mxu0 0
  %331 = vmatpush1.bf16.msra.mxu0 0
  %332 = vmatprep.subr.bf16.mxu0 0
  %333 = vmatpush1.bf16.msra.mxu0 0
  %334 = vmatprep.subr.bf16.mxu0 0
  %335 = vmatpush1.bf16.msra.mxu0 0
  %336 = vmatprep.mubr.bf16.mxu0 0
  %337 = vmatmul.mubr.bf16.gmra.mrb[0].mxu0 %v302
  %v338 = vpop.f32.mrb[0].mxu0
  %v339 = vadd.f32 %v275, %v338
  %v340 = vpop.f32.mrb[0].mxu0
  %v341 = vpop.f32.mrb[0].mxu0
  %v342 = vpop.f32.mrb[0].mxu0
  %343 = vdwg.mxu0
  %345 = vrot.lane.b32.xlu0 %v186, 32
  %v346 = vpop.permute.xlu0 %345
  %v348 = vsel %vm62, %v339, %v346
  %349 = vst.msk [vmem:[%s10] sm:$0xff] %vm147, %v348
  // Predicated region
  $region42: #{vae_forward.1} parent=0 // pred_check
    _
  $region43: #{vae_forward.1} parent=0 // pred_check_branch
    %351 = sbr.rel (0) target = $region45
  $region44: #{vae_forward.1} parent=0 // pred_region
    _
  $region45: #{vae_forward.1} parent=0 // pred_fallthru
    _
  // Predicated region
  $region46: #{vae_forward.1} parent=0 // pred_check
    _
  $region47: #{vae_forward.1} parent=0 // pred_check_branch
    %353 = sbr.rel (0) target = $region49
  $region48: #{vae_forward.1} parent=0 // pred_region
    _
  $region49: #{vae_forward.1} parent=0 // pred_fallthru
    _

</llo_original>
